<compile_context>
chip_gen: v7x
topology: tpu7x:2x2x1
jax: 0.10.0
libtpu: 0.0.40
codegen_flags: <defaults>
</compile_context>

<pallas_src>
import functools

import jax
import jax.numpy as jnp
from jax.experimental import pallas as pl
from jax.experimental.pallas import tpu as pltpu

ROW_TILE = 128    # batch-tile granularity (lane width of the (1, TB) output block)
TB_MAX = 4096     # max batch-tile rows per grid step


def _round_up(a, m):
    return (a + m - 1) // m * m


def _choose_tb(B, Din, H, tb_max):
    """Pick the batch tile TB (power-of-two multiple of 128, VMEM-capped)."""
    B128 = _round_up(max(B, 1), ROW_TILE)
    if B128 < 2 * ROW_TILE:
        # Tiny batch: a single full-array block (block dims == array dims is legal).
        return B
    # Rough per-row VMEM footprint: f32 x block + f32/bf16 intermediates + out col.
    row_bytes = Din * 4 + 2 * H * (4 + 2) + 8
    cap = min(tb_max, max(ROW_TILE, ((4 << 20) // max(row_bytes, 1)) // ROW_TILE * ROW_TILE))
    cap = min(cap, B128 // 2)  # keep >= 2 grid steps (v7x dual-TC sharding)
    tb = ROW_TILE
    while tb * 2 <= cap:
        tb *= 2
    return tb


def classifier_kernel(x_ref, w1_ref, b1_ref, w2_ref, b2_ref, w3_ref, b3_ref, out_ref):
    # In-kernel f32 -> bf16 cast of the activations (no wrapper pass over x).
    x = x_ref[...].astype(jnp.bfloat16)

    # Layer 1: bf16 MXU matmul, f32 accumulation; bias + ReLU in f32.
    h1 = jnp.dot(x, w1_ref[...], preferred_element_type=jnp.float32)
    h1 = jnp.maximum(h1 + b1_ref[...], 0.0)

    # Layer 2.
    h2 = jnp.dot(h1.astype(jnp.bfloat16), w2_ref[...],
                 preferred_element_type=jnp.float32)
    h2 = jnp.maximum(h2 + b2_ref[...], 0.0)

    # Head, transposed: (1, H) contracted with (TB, H) on H -> (1, TB).
    # Lane-dense along batch, so the output store is full-lane and tiny.
    logits_t = jax.lax.dot_general(
        w3_ref[...], h2.astype(jnp.bfloat16),
        dimension_numbers=(((1,), (1,)), ((), ())),
        preferred_element_type=jnp.float32)
    logits_t = logits_t + b3_ref[...]          # (1,1) broadcast over lanes

    # Sigmoid with a single EUP transcendental: sigmoid(z) = 0.5*(tanh(z/2)+1).
    out_ref[...] = 0.5 * (jnp.tanh(0.5 * logits_t) + 1.0)


@functools.partial(jax.jit, static_argnames=("tb_max",))
def classifier_forward(x, params, tb_max=TB_MAX):
    """x: (B, input_dim) float32. params: dict of f32 weights/biases.

    Returns sigmoid(MLP(x)) with shape (B, 1), float32.
    """
    B, Din = x.shape
    H = params["w1"].shape[1]

    # Small, one-off wrapper-side weight casts (weights are tiny vs. x).
    w1 = params["w1"].astype(jnp.bfloat16)     # (Din, H)
    w2 = params["w2"].astype(jnp.bfloat16)     # (H,   H)
    w3 = params["w3"].astype(jnp.bfloat16)     # (1,   H)  nn.Linear native layout
    b1 = params["b1"].astype(jnp.float32)      # (1,   H)
    b2 = params["b2"].astype(jnp.float32)      # (1,   H)
    b3 = params["b3"].astype(jnp.float32)      # (1,   1)

    TB = _choose_tb(B, Din, H, tb_max)
    grid = (pl.cdiv(B, TB),)

    # VMEM budget: double-buffered x/out blocks, resident (possibly 2x-buffered)
    # params, plus f32/bf16 intermediates.  Clamp under v7x's 64 MiB physical.
    x_blk = TB * Din * 4
    o_blk = TB * 4
    h_blk = 2 * TB * H * (4 + 2)
    p_bytes = (w1.size + w2.size + w3.size) * 2 + (b1.size + b2.size + b3.size) * 4
    need = 2 * (x_blk + o_blk) + 2 * p_bytes + h_blk
    vmem_limit = int(min(48 << 20, max(8 << 20, 2 * need)))

    cost = pl.CostEstimate(
        flops=2 * B * (Din * H + H * H + H * 1),
        transcendentals=B,                                   # one tanh per row
        bytes_accessed=B * Din * 4 + p_bytes + B * 4,
    )

    out = pl.pallas_call(
        classifier_kernel,
        out_shape=jax.ShapeDtypeStruct((1, B), jnp.float32),
        grid_spec=pltpu.PrefetchScalarGridSpec(
            num_scalar_prefetch=0,
            grid=grid,
            in_specs=[
                pl.BlockSpec((TB, Din), lambda i: (i, 0)),   # x: batch-tiled
                pl.BlockSpec(w1.shape, lambda i: (0, 0)),    # params: VMEM-resident
                pl.BlockSpec(b1.shape, lambda i: (0, 0)),
                pl.BlockSpec(w2.shape, lambda i: (0, 0)),
                pl.BlockSpec(b2.shape, lambda i: (0, 0)),
                pl.BlockSpec(w3.shape, lambda i: (0, 0)),
                pl.BlockSpec(b3.shape, lambda i: (0, 0)),
            ],
            out_specs=pl.BlockSpec((1, TB), lambda i: (0, i)),
        ),
        compiler_params=pltpu.CompilerParams(
            dimension_semantics=("parallel",),
            vmem_limit_bytes=vmem_limit,
        ),
        cost_estimate=cost,
    )(x, w1, b1, w2, b2, w3, b3)

    # (1, B) -> (B, 1); pure reshape, same element order.
    return out.reshape(B, 1)


def init_params(key, input_dim, hidden):
    """Deterministic init (uniform, matching nn.Linear's fan-in scaling)."""
    ks = jax.random.split(key, 6)

    def lin(kw, kb, fan_in, fan_out, transpose_w):
        bound = 1.0 / (fan_in ** 0.5)
        shape = (fan_out, fan_in) if transpose_w else (fan_in, fan_out)
        w = jax.random.uniform(kw, shape, jnp.float32, -bound, bound)
        b = jax.random.uniform(kb, (1, fan_out), jnp.float32, -bound, bound)
        return w, b

    w1, b1 = lin(ks[0], ks[1], input_dim, hidden, transpose_w=False)   # (Din, H)
    w2, b2 = lin(ks[2], ks[3], hidden, hidden, transpose_w=False)      # (H, H)
    w3, b3 = lin(ks[4], ks[5], hidden, 1, transpose_w=True)            # (1, H)
    return {"w1": w1, "b1": b1, "w2": w2, "b2": b2, "w3": w3, "b3": b3}


if __name__ == "__main__":
    key = jax.random.PRNGKey(0)
    k_x, k_p = jax.random.split(key)

    batch = 8
    input_dim = 32
    hidden = 64  # hidden_layer_size != 1 -> 3-layer MLP branch

    x = jax.random.normal(k_x, (batch, input_dim), dtype=jnp.float32)
    params = init_params(k_p, input_dim, hidden)

    out = classifier_forward(x, params)
    jax.block_until_ready(out)

    # Pure-JAX f32 reference of the same forward pass.
    h1 = jnp.maximum(x @ params["w1"] + params["b1"], 0.0)
    h2 = jnp.maximum(h1 @ params["w2"] + params["b2"], 0.0)
    ref = jax.nn.sigmoid(h2 @ params["w3"].T + params["b3"])

    assert out.shape == (batch, 1), out.shape
    # bf16 matmuls vs f32 reference -> relaxed tolerance.
    assert jnp.allclose(out, ref, atol=2e-2), "mismatch vs reference"

    print("KERNEL_OK")
</pallas_src>

<mosaic_0001>
module attributes {stable_mosaic.version = 11 : i64} {
  func.func @classifier_kernel(%arg0: i32, %arg1: memref<8x32xf32, #tpu.memory_space<vmem>>, %arg2: memref<32x64xbf16, #tpu.memory_space<vmem>>, %arg3: memref<1x64xf32, #tpu.memory_space<vmem>>, %arg4: memref<64x64xbf16, #tpu.memory_space<vmem>>, %arg5: memref<1x64xf32, #tpu.memory_space<vmem>>, %arg6: memref<1x64xbf16, #tpu.memory_space<vmem>>, %arg7: memref<1x1xf32, #tpu.memory_space<vmem>>, %arg8: memref<1x8xf32, #tpu.memory_space<vmem>>) attributes {dimension_semantics = [#tpu.dimension_semantics<parallel>], iteration_bounds = array<i64: 1>, scalar_prefetch = 0 : i64, scratch_operands = 0 : i64, tpu.core_type = #tpu.core_type<tc>, window_params = [{transform_indices = @transform_0, window_bounds = array<i64: 8, 32>}, {pipeline_mode = #tpu.pipeline_mode<synchronous>, transform_indices = @transform_1, window_bounds = array<i64: 32, 64>}, {pipeline_mode = #tpu.pipeline_mode<synchronous>, transform_indices = @transform_2, window_bounds = array<i64: 1, 64>}, {pipeline_mode = #tpu.pipeline_mode<synchronous>, transform_indices = @transform_3, window_bounds = array<i64: 64, 64>}, {pipeline_mode = #tpu.pipeline_mode<synchronous>, transform_indices = @transform_4, window_bounds = array<i64: 1, 64>}, {pipeline_mode = #tpu.pipeline_mode<synchronous>, transform_indices = @transform_5, window_bounds = array<i64: 1, 64>}, {pipeline_mode = #tpu.pipeline_mode<synchronous>, transform_indices = @transform_6, window_bounds = array<i64: 1, 1>}, {transform_indices = @transform_7, window_bounds = array<i64: 1, 8>}]} {
    %c0 = arith.constant 0 : index
    %c0_0 = arith.constant 0 : index
    %0 = vector.load %arg1[%c0, %c0_0] : memref<8x32xf32, #tpu.memory_space<vmem>>, vector<8x32xf32>
    %1 = arith.truncf %0 : vector<8x32xf32> to vector<8x32xbf16>
    %c0_1 = arith.constant 0 : index
    %c0_2 = arith.constant 0 : index
    %2 = vector.load %arg2[%c0_1, %c0_2] : memref<32x64xbf16, #tpu.memory_space<vmem>>, vector<32x64xbf16>
    %cst = arith.constant dense<0.000000e+00> : vector<8x64xf32>
    %3 = tpu.matmul %1, %2, %cst {dimension_numbers = #tpu.dot_dimension_numbers<[1], [0], [0], [1], [0, 0, 1, 1], [], []>} : vector<8x32xbf16>, vector<32x64xbf16>, vector<8x64xf32> -> vector<8x64xf32>
    %c0_3 = arith.constant 0 : index
    %c0_4 = arith.constant 0 : index
    %4 = vector.load %arg3[%c0_3, %c0_4] : memref<1x64xf32, #tpu.memory_space<vmem>>, vector<1x64xf32>
    %5 = vector.broadcast %4 : vector<1x64xf32> to vector<8x64xf32>
    %6 = arith.addf %3, %5 : vector<8x64xf32>
    %cst_5 = arith.constant 0.000000e+00 : f32
    %7 = vector.broadcast %cst_5 : f32 to vector<8x64xf32>
    %8 = arith.maximumf %6, %7 : vector<8x64xf32>
    %9 = arith.truncf %8 : vector<8x64xf32> to vector<8x64xbf16>
    %c0_6 = arith.constant 0 : index
    %c0_7 = arith.constant 0 : index
    %10 = vector.load %arg4[%c0_6, %c0_7] : memref<64x64xbf16, #tpu.memory_space<vmem>>, vector<64x64xbf16>
    %cst_8 = arith.constant dense<0.000000e+00> : vector<8x64xf32>
    %11 = tpu.matmul %9, %10, %cst_8 {dimension_numbers = #tpu.dot_dimension_numbers<[1], [0], [0], [1], [0, 0, 1, 1], [], []>} : vector<8x64xbf16>, vector<64x64xbf16>, vector<8x64xf32> -> vector<8x64xf32>
    %c0_9 = arith.constant 0 : index
    %c0_10 = arith.constant 0 : index
    %12 = vector.load %arg5[%c0_9, %c0_10] : memref<1x64xf32, #tpu.memory_space<vmem>>, vector<1x64xf32>
    %13 = vector.broadcast %12 : vector<1x64xf32> to vector<8x64xf32>
    %14 = arith.addf %11, %13 : vector<8x64xf32>
    %cst_11 = arith.constant 0.000000e+00 : f32
    %15 = vector.broadcast %cst_11 : f32 to vector<8x64xf32>
    %16 = arith.maximumf %14, %15 : vector<8x64xf32>
    %c0_12 = arith.constant 0 : index
    %c0_13 = arith.constant 0 : index
    %17 = vector.load %arg6[%c0_12, %c0_13] : memref<1x64xbf16, #tpu.memory_space<vmem>>, vector<1x64xbf16>
    %18 = arith.truncf %16 : vector<8x64xf32> to vector<8x64xbf16>
    %cst_14 = arith.constant dense<0.000000e+00> : vector<1x8xf32>
    %19 = tpu.matmul %17, %18, %cst_14 {dimension_numbers = #tpu.dot_dimension_numbers<[1], [1], [0], [0], [0, 0, 1, 0], [], []>} : vector<1x64xbf16>, vector<8x64xbf16>, vector<1x8xf32> -> vector<1x8xf32>
    %c0_15 = arith.constant 0 : index
    %c0_16 = arith.constant 0 : index
    %20 = vector.load %arg7[%c0_15, %c0_16] : memref<1x1xf32, #tpu.memory_space<vmem>>, vector<1x1xf32>
    %21 = vector.broadcast %20 : vector<1x1xf32> to vector<1x8xf32>
    %22 = arith.addf %19, %21 : vector<1x8xf32>
    %cst_17 = arith.constant 5.000000e-01 : f32
    %23 = vector.broadcast %cst_17 : f32 to vector<1x8xf32>
    %24 = arith.mulf %23, %22 : vector<1x8xf32>
    %25 = math.tanh %24 : vector<1x8xf32>
    %cst_18 = arith.constant 1.000000e+00 : f32
    %26 = vector.broadcast %cst_18 : f32 to vector<1x8xf32>
    %27 = arith.addf %25, %26 : vector<1x8xf32>
    %cst_19 = arith.constant 5.000000e-01 : f32
    %28 = vector.broadcast %cst_19 : f32 to vector<1x8xf32>
    %29 = arith.mulf %28, %27 : vector<1x8xf32>
    %c0_20 = arith.constant 0 : index
    %c0_21 = arith.constant 0 : index
    %30 = vector.load %arg8[%c0_20, %c0_21] : memref<1x8xf32, #tpu.memory_space<vmem>>, vector<1x8xf32>
    tpu.vector_store %arg8[%c0_20, %c0_21], %29 {strides = array<i32>} : memref<1x8xf32, #tpu.memory_space<vmem>>, vector<1x8xf32>,
    return
  }
  func.func @transform_0(%arg0: i32) -> (i32, i32) {
    %c0_i32 = arith.constant 0 : i32
    %c0_i32_0 = arith.constant 0 : i32
    return %arg0, %c0_i32 : i32, i32
  }
  func.func @transform_1(%arg0: i32) -> (i32, i32) {
    %c0_i32 = arith.constant 0 : i32
    %c0_i32_0 = arith.constant 0 : i32
    %c0_i32_1 = arith.constant 0 : i32
    return %c0_i32, %c0_i32_0 : i32, i32
  }
  func.func @transform_2(%arg0: i32) -> (i32, i32) {
    %c0_i32 = arith.constant 0 : i32
    %c0_i32_0 = arith.constant 0 : i32
    %c0_i32_1 = arith.constant 0 : i32
    return %c0_i32, %c0_i32_0 : i32, i32
  }
  func.func @transform_3(%arg0: i32) -> (i32, i32) {
    %c0_i32 = arith.constant 0 : i32
    %c0_i32_0 = arith.constant 0 : i32
    %c0_i32_1 = arith.constant 0 : i32
    return %c0_i32, %c0_i32_0 : i32, i32
  }
  func.func @transform_4(%arg0: i32) -> (i32, i32) {
    %c0_i32 = arith.constant 0 : i32
    %c0_i32_0 = arith.constant 0 : i32
    %c0_i32_1 = arith.constant 0 : i32
    return %c0_i32, %c0_i32_0 : i32, i32
  }
  func.func @transform_5(%arg0: i32) -> (i32, i32) {
    %c0_i32 = arith.constant 0 : i32
    %c0_i32_0 = arith.constant 0 : i32
    %c0_i32_1 = arith.constant 0 : i32
    return %c0_i32, %c0_i32_0 : i32, i32
  }
  func.func @transform_6(%arg0: i32) -> (i32, i32) {
    %c0_i32 = arith.constant 0 : i32
    %c0_i32_0 = arith.constant 0 : i32
    %c0_i32_1 = arith.constant 0 : i32
    return %c0_i32, %c0_i32_0 : i32, i32
  }
  func.func @transform_7(%arg0: i32) -> (i32, i32) {
    %c0_i32 = arith.constant 0 : i32
    %c0_i32_0 = arith.constant 0 : i32
    return %c0_i32, %arg0 : i32, i32
  }
}

</mosaic_0001>

<llo_original>
// kernel: classifier_forward.1
$region0: #{classifier_forward.1}
  #allocation0 [shape = 'u32[]', space=smem, size = 0x4, offset = 0x4, fixed_abs, tag = 'smem constant byte address 0x4 - core index']
  #allocation1 [shape = 'u32[144,128]{1,0:T(1,128)}', space=vmem, size = 0x12000, scoped, tag = 'internal scratch']
  #allocation2 [shape = 'f32[1,1]{1,0:T(1,128)S(1)}', space=vmem, size = 0x200, scoped, tag = 'scoped memory for classifier_forward.1']
  %s0 = inlined_call_operand.vmem [shape: f32[8,32], index: 0, kind: input, shape index: {}]
  %s1 = inlined_call_operand.vmem [shape: bf16[32,64], index: 1, kind: input, shape index: {}]
  %s2 = inlined_call_operand.vmem [shape: f32[1,64], index: 2, kind: input, shape index: {}]
  %s3 = inlined_call_operand.vmem [shape: bf16[64,64], index: 3, kind: input, shape index: {}]
  %s4 = inlined_call_operand.vmem [shape: f32[1,64], index: 4, kind: input, shape index: {}]
  %s5 = inlined_call_operand.vmem [shape: bf16[1,64], index: 5, kind: input, shape index: {}]
  %s6 = inlined_call_operand.<no memory space> [shape: f32[1,1], index: 6, kind: input, shape index: {}]
  %s7 = inlined_call_operand.hbm [shape: f32[1,8], index: 7, kind: output, shape index: {}]
  %s8 = sld [smem:[#allocation0]]
  $region38: #{classifier_forward.1} parent=0
    _
  %s10 = ssub.s32 1, %s8
  %s11 = scalar_select 0, %s10, %s8
  %v12 = vstv %s6
  %13 = vst [vmem:[#allocation2] sm:$0x1] %v12
  $region1: #{classifier_forward.1} parent=0
    #allocation3 [shape = 'u8[512]{0}', space=vmem, size = 0x400, scoped, tag = 'output window, operand 0, single buffered']
    #allocation4 [shape = 's32[1]{0}', space=sflag, size = 0x4, scoped, tag = 'scoped memory for classifier_forward.1']
    %14 = vsyncpa [#allocation4], 0
    // Predicated region
    $region2: #{classifier_forward.1} parent=1 // pred_check
      _
    $region3: #{classifier_forward.1} parent=1 // pred_check_branch
      %16 = sbr.rel (0) target = $region5
    $region4: #{classifier_forward.1} parent=1 // pred_region
      _
    $region5: #{classifier_forward.1} parent=1 // pred_fallthru
      _
    // Predicated region
    $region6: #{classifier_forward.1} parent=1 // pred_check
      _
    $region7: #{classifier_forward.1} parent=1 // pred_check_branch
      %18 = sbr.rel (0) target = $region9
    $region8: #{classifier_forward.1} parent=1 // pred_region
      _
    $region9: #{classifier_forward.1} parent=1 // pred_fallthru
      _
    // Predicated region
    $region10: #{classifier_forward.1} parent=1 // pred_check
      _
    $region11: #{classifier_forward.1} parent=1 // pred_check_branch
      %20 = sbr.rel (0) target = $region13
    $region12: #{classifier_forward.1} parent=1 // pred_region
      _
    $region13: #{classifier_forward.1} parent=1 // pred_fallthru
      _
    // Predicated region
    $region14: #{classifier_forward.1} parent=1 // pred_check
      _
    $region15: #{classifier_forward.1} parent=1 // pred_check_branch
      %22 = sbr.rel (0) target = $region17
    $region16: #{classifier_forward.1} parent=1 // pred_region
      _
    $region17: #{classifier_forward.1} parent=1 // pred_fallthru
      _
    // Predicated region
    $region18: #{classifier_forward.1} parent=1 // pred_check
      _
    $region19: #{classifier_forward.1} parent=1 // pred_check_branch
      %24 = sbr.rel (0) target = $region21
    $region20: #{classifier_forward.1} parent=1 // pred_region
      _
    $region21: #{classifier_forward.1} parent=1 // pred_fallthru
      _
    // Predicated region
    $region22: #{classifier_forward.1} parent=1 // pred_check
      _
    $region23: #{classifier_forward.1} parent=1 // pred_check_branch
      %26 = sbr.rel (0) target = $region25
    $region24: #{classifier_forward.1} parent=1 // pred_region
      _
    $region25: #{classifier_forward.1} parent=1 // pred_fallthru
      _
    // Predicated region
    $region26: #{classifier_forward.1} parent=1 // pred_check
      _
    $region27: #{classifier_forward.1} parent=1 // pred_check_branch
      %28 = sbr.rel (0) target = $region29
    $region28: #{classifier_forward.1} parent=1 // pred_region
      _
    $region29: #{classifier_forward.1} parent=1 // pred_fallthru
      _
    %v30 = vld [vmem:[%s0] sm:$0xff]
    %v31 = vpack.c.bf16 %v30, %v30
    %v32 = vld [vmem:[%s1] sm:$0xf]
    %v33 = vld [vmem:[%s1 + $0x4] sm:$0xf]
    %v34 = vld [vmem:[%s1 + $0x8] sm:$0xf]
    %v35 = vld [vmem:[%s1 + $0xc] sm:$0xf]
    %v36 = vld [vmem:[%s2] sm:$0x1]
    %v38 = vlaneseq
    %v39 = vshrl.u32 %v38, 7
    %v40 = vsub.s32 0, %v39
    %v41 = vrot.slane %v36, %v40
    %v47 = vunpack.c.l.b16 %v32
    %v48 = vunpack.c.l.b16 %v33
    %v49 = vunpack.c.l.b16 %v34
    %v50 = vunpack.c.l.b16 %v35
    %v51 = vpack.c.b16 %v48, %v47
    %v52 = vpack.c.b16 %v50, %v49
    %vm55 = vcmask 261120
    %v57 = vsel %vm55, %v31, 0
    %59 = vmatprep.subr.bf16.mxu0 0
    %60 = vmatpush1.bf16.msra.mxu0 %v51
    %61 = vmatprep.subr.bf16.mxu0 0
    %62 = vmatpush1.bf16.msra.mxu0 %v52
    %63 = vmatprep.subr.bf16.mxu0 0
    %64 = vmatpush1.bf16.msra.mxu0 0
    %65 = vmatprep.subr.bf16.mxu0 0
    %66 = vmatpush1.bf16.msra.mxu0 0
    %67 = vmatprep.subr.bf16.mxu0 0
    %68 = vmatpush1.bf16.msra.mxu0 0
    %69 = vmatprep.subr.bf16.mxu0 0
    %70 = vmatpush1.bf16.msra.mxu0 0
    %71 = vmatprep.subr.bf16.mxu0 0
    %72 = vmatpush1.bf16.msra.mxu0 0
    %73 = vmatprep.subr.bf16.mxu0 0
    %74 = vmatpush1.bf16.msra.mxu0 0
    %75 = vmatprep.subr.bf16.mxu0 0
    %76 = vmatpush1.bf16.msra.mxu0 0
    %77 = vmatprep.subr.bf16.mxu0 0
    %78 = vmatpush1.bf16.msra.mxu0 0
    %79 = vmatprep.subr.bf16.mxu0 0
    %80 = vmatpush1.bf16.msra.mxu0 0
    %81 = vmatprep.subr.bf16.mxu0 0
    %82 = vmatpush1.bf16.msra.mxu0 0
    %83 = vmatprep.subr.bf16.mxu0 0
    %84 = vmatpush1.bf16.msra.mxu0 0
    %85 = vmatprep.subr.bf16.mxu0 0
    %86 = vmatpush1.bf16.msra.mxu0 0
    %87 = vmatprep.subr.bf16.mxu0 0
    %88 = vmatpush1.bf16.msra.mxu0 0
    %89 = vmatprep.subr.bf16.mxu0 0
    %90 = vmatpush1.bf16.msra.mxu0 0
    %91 = vmatprep.mubr.bf16.mxu0 0
    %92 = vmatmul.mubr.bf16.gmra.mrb[0].mxu0 %v57
    %v93 = vpop.f32.mrb[0].mxu0
    %v94 = vadd.f32 %v41, %v93
    %v95 = vpop.f32.mrb[0].mxu0
    %v96 = vpop.f32.mrb[0].mxu0
    %v97 = vpop.f32.mrb[0].mxu0
    %98 = vdwg.mxu0
    %v99 = vmax.f32 %v94, 0.0
    %v100 = vpack.c.bf16 %v99, %v99
    %v101 = vld [vmem:[%s3] sm:$0xf]
    %v102 = vld [vmem:[%s3 + $0x4] sm:$0xf]
    %v103 = vld [vmem:[%s3 + $0x8] sm:$0xf]
    %v104 = vld [vmem:[%s3 + $0xc] sm:$0xf]
    %v105 = vld [vmem:[%s3 + $0x10] sm:$0xf]
    %v106 = vld [vmem:[%s3 + $0x14] sm:$0xf]
    %v107 = vld [vmem:[%s3 + $0x18] sm:$0xf]
    %v108 = vld [vmem:[%s3 + $0x1c] sm:$0xf]
    %v109 = vld [vmem:[%s4] sm:$0x1]
    %v111 = vlaneseq
    %v112 = vshrl.u32 %v111, 7
    %v113 = vsub.s32 0, %v112
    %v114 = vrot.slane %v109, %v113
    %v124 = vunpack.c.l.b16 %v101
    %v125 = vunpack.c.l.b16 %v102
    %v126 = vunpack.c.l.b16 %v103
    %v127 = vunpack.c.l.b16 %v104
    %v128 = vunpack.c.l.b16 %v105
    %v129 = vunpack.c.l.b16 %v106
    %v130 = vunpack.c.l.b16 %v107
    %v131 = vunpack.c.l.b16 %v108
    %v132 = vpack.c.b16 %v125, %v124
    %v133 = vpack.c.b16 %v127, %v126
    %v134 = vpack.c.b16 %v129, %v128
    %v135 = vpack.c.b16 %v131, %v130
    %vm140 = vcmask 523264
    %v142 = vsel %vm140, %v100, 0
    %144 = vmatprep.subr.bf16.mxu0 0
    %145 = vmatpush1.bf16.msra.mxu0 %v132
    %146 = vmatprep.subr.bf16.mxu0 0
    %147 = vmatpush1.bf16.msra.mxu0 %v133
    %148 = vmatprep.subr.bf16.mxu0 0
    %149 = vmatpush1.bf16.msra.mxu0 %v134
    %150 = vmatprep.subr.bf16.mxu0 0
    %151 = vmatpush1.bf16.msra.mxu0 %v135
    %152 = vmatprep.subr.bf16.mxu0 0
    %153 = vmatpush1.bf16.msra.mxu0 0
    %154 = vmatprep.subr.bf16.mxu0 0
    %155 = vmatpush1.bf16.msra.mxu0 0
    %156 = vmatprep.subr.bf16.mxu0 0
    %157 = vmatpush1.bf16.msra.mxu0 0
    %158 = vmatprep.subr.bf16.mxu0 0
    %159 = vmatpush1.bf16.msra.mxu0 0
    %160 = vmatprep.subr.bf16.mxu0 0
    %161 = vmatpush1.bf16.msra.mxu0 0
    %162 = vmatprep.subr.bf16.mxu0 0
    %163 = vmatpush1.bf16.msra.mxu0 0
    %164 = vmatprep.subr.bf16.mxu0 0
    %165 = vmatpush1.bf16.msra.mxu0 0
    %166 = vmatprep.subr.bf16.mxu0 0
    %167 = vmatpush1.bf16.msra.mxu0 0
    %168 = vmatprep.subr.bf16.mxu0 0
    %169 = vmatpush1.bf16.msra.mxu0 0
    %170 = vmatprep.subr.bf16.mxu0 0
    %171 = vmatpush1.bf16.msra.mxu0 0
    %172 = vmatprep.subr.bf16.mxu0 0
    %173 = vmatpush1.bf16.msra.mxu0 0
    %174 = vmatprep.subr.bf16.mxu0 0
    %175 = vmatpush1.bf16.msra.mxu0 0
    %176 = vmatprep.mubr.bf16.mxu0 0
    %177 = vmatmul.mubr.bf16.gmra.mrb[0].mxu0 %v142
    %v178 = vpop.f32.mrb[0].mxu0
    %v179 = vadd.f32 %v114, %v178
    %v180 = vpop.f32.mrb[0].mxu0
    %v181 = vpop.f32.mrb[0].mxu0
    %v182 = vpop.f32.mrb[0].mxu0
    %183 = vdwg.mxu0
    %v184 = vmax.f32 %v179, 0.0
    %v185 = vld [vmem:[%s5] sm:$0x1]
    %v186 = vpack.c.bf16 %v184, %v184
    %v187 = vld [vmem:[#allocation2] sm:$0x1]
    %189 = vset.pattern.permute.xlu0 0
    %190 = vperm.xlu0 %189, %v187
    %v191 = vpop.permute.xlu0 %190
    %v193 = vlaneseq
    %v194 = vshrl.u32 %v193, 7
    %v195 = vsub.s32 0, %v194
    %v196 = vrot.slane %v191, %v195
    %v198 = vsel %vm140, %v185, 0
    %v201 = vsel %vm140, %v186, 0
    %203 = vmatprep.subr.bf16.mxu0 0
    %204 = vmatpush1.bf16.xpose.msra.mxu0 %v201
    %205 = vmatprep.subr.bf16.mxu0 0
    %206 = vmatpush1.bf16.xpose.msra.mxu0 0
    %207 = vmatprep.subr.bf16.mxu0 0
    %208 = vmatpush1.bf16.xpose.msra.mxu0 0
    %209 = vmatprep.subr.bf16.mxu0 0
    %210 = vmatpush1.bf16.xpose.msra.mxu0 0
    %211 = vmatprep.subr.bf16.mxu0 0
    %212 = vmatpush1.bf16.xpose.msra.mxu0 0
    %213 = vmatprep.subr.bf16.mxu0 0
    %214 = vmatpush1.bf16.xpose.msra.mxu0 0
    %215 = vmatprep.subr.bf16.mxu0 0
    %216 = vmatpush1.bf16.xpose.msra.mxu0 0
    %217 = vmatprep.subr.bf16.mxu0 0
    %218 = vmatpush1.bf16.xpose.msra.mxu0 0
    %219 = vmatprep.subr.bf16.mxu0 0
    %220 = vmatpush1.bf16.xpose.msra.mxu0 0
    %221 = vmatprep.subr.bf16.mxu0 0
    %222 = vmatpush1.bf16.xpose.msra.mxu0 0
    %223 = vmatprep.subr.bf16.mxu0 0
    %224 = vmatpush1.bf16.xpose.msra.mxu0 0
    %225 = vmatprep.subr.bf16.mxu0 0
    %226 = vmatpush1.bf16.xpose.msra.mxu0 0
    %227 = vmatprep.subr.bf16.mxu0 0
    %228 = vmatpush1.bf16.xpose.msra.mxu0 0
    %229 = vmatprep.subr.bf16.mxu0 0
    %230 = vmatpush1.bf16.xpose.msra.mxu0 0
    %231 = vmatprep.subr.bf16.mxu0 0
    %232 = vmatpush1.bf16.xpose.msra.mxu0 0
    %233 = vmatprep.subr.bf16.mxu0 0
    %234 = vmatpush1.bf16.xpose.msra.mxu0 0
    %235 = vmatprep.mubr.bf16.mxu0 0
    %236 = vmatmul.mubr.bf16.gmra.mrb[0].mxu0 %v198
    %v237 = vpop.f32.mrb[0].mxu0
    %v238 = vadd.f32 %v196, %v237
    %v239 = vpop.f32.mrb[0].mxu0
    %v240 = vpop.f32.mrb[0].mxu0
    %v241 = vpop.f32.mrb[0].mxu0
    %242 = vdwg.mxu0
    %v243 = vmul.f32 %v238, 0.5
    %v244 = vtanh.pop %v243
    %v245 = vadd.f32 %v244, 1.0
    %v246 = vmul.f32 %v245, 0.5
    %vm247 = vcmask 57344
    %248 = vst.msk [vmem:[#allocation3] sm:$0x1] %vm247, %v246
    // Predicated region
    $region30: #{classifier_forward.1} parent=1 // pred_check
      _
    $region31: #{classifier_forward.1} parent=1 // pred_check_branch
      %250 = sbr.rel (0) target = $region33
    $region32: #{classifier_forward.1} parent=1 // pred_region
      %s252 = ssub.s32 16, 16
      %253 = vsyncadd [#allocation4], %s252
      %s255 = sshll.u32 [#allocation3], 4
      %s256 = int_to_ptr.vmem [resolvable:$true] %s255
      %258 = dma.vmem_to_hbm [thread:$0]  %s256, 16, %s7, [#allocation4]
    $region33: #{classifier_forward.1} parent=1 // pred_fallthru
      _
    // Predicated region
    $region34: #{classifier_forward.1} parent=1 // pred_check
      _
    $region35: #{classifier_forward.1} parent=1 // pred_check_branch
      %260 = sbr.rel (0) target = $region37
    $region36: #{classifier_forward.1} parent=1 // pred_region
      %261 = dma.done [#allocation4], 16
    $region37: #{classifier_forward.1} parent=1 // pred_fallthru
      _
    %262 = vsyncpa [#allocation4], 1

</llo_original>
